<compile_context>
chip_gen: v5e
topology: v5e:2x2
jax: 0.10.0
libtpu: 0.0.40
codegen_flags: <defaults>
</compile_context>

<pallas_src>
import jax
import jax.numpy as jnp
from jax.experimental import pallas as pl
from jax.experimental.pallas import tpu as pltpu

CONV_K = 5          # nn.Conv2d(Cc, d_model, kernel_size=(1, 5), padding=0)
NUM_HWY_LAYERS = 2  # HighwayEncoder(2, d_model)


def _round_up(x, m):
    return (x + m - 1) // m * m


def qanet_embedding_kernel(word_ref, char_ref, cw_ref, cb_ref,
                           rww_ref, rwc_ref, hw_ref, hb_ref, out_ref):
    d_model = out_ref.shape[1]
    n_pairs = cw_ref.shape[0]

    x_char = char_ref[...]                  # (tile_n, L*Cc) bf16, lane-dense

    # --- char CNN: block-banded dense-K matmuls, 2 conv positions / matmul ---
    # pair p: columns [:d] -> position 2p, [d:] -> position 2p+1; online max
    # keeps the live intermediate at (tile_n, d_model) f32 (no big accumulator).
    pp = jnp.dot(x_char, cw_ref[0], preferred_element_type=jnp.float32)
    char_feat = jnp.maximum(pp[:, :d_model], pp[:, d_model:])
    for p in range(1, n_pairs):
        pp = jnp.dot(x_char, cw_ref[p], preferred_element_type=jnp.float32)
        char_feat = jnp.maximum(char_feat,
                                jnp.maximum(pp[:, :d_model], pp[:, d_model:]))
    # bias + relu hoisted outside the position max (monotone per-channel ops).
    char_feat = jnp.maximum(char_feat + cb_ref[...], 0.0)

    # --- concat(word, char) -> bias-free resizer, done as split matmuls ------
    h = (jnp.dot(word_ref[...], rww_ref[...],
                 preferred_element_type=jnp.float32)
         + jnp.dot(char_feat.astype(rwc_ref.dtype), rwc_ref[...],
                   preferred_element_type=jnp.float32))

    # --- 2-layer highway, fused (gate | transform) matmul, N = 2*d_model -----
    for l in range(NUM_HWY_LAYERS):
        gt = (jnp.dot(h.astype(hw_ref.dtype), hw_ref[l],
                      preferred_element_type=jnp.float32)
              + hb_ref[l])                               # (tile_n, 2*d_model)
        g = jax.nn.sigmoid(gt[:, :d_model])
        t = jnp.maximum(gt[:, d_model:], 0.0)
        h = g * t + (1.0 - g) * h

    out_ref[...] = h.astype(out_ref.dtype)


def qanet_embedding(word_idxs, char_idxs, params, *, tile_n=1024):
    word_vectors = params["word_vectors"]
    char_vectors = params["char_vectors"]
    B, S = word_idxs.shape
    L = char_idxs.shape[2]
    Dw = word_vectors.shape[1]
    Cc = char_vectors.shape[1]
    d_model = params["conv_w"].shape[2]
    N = B * S
    P = L - (CONV_K - 1)            # valid conv output positions
    n_pairs = (P + 1) // 2

    # Row-tile selection: big tiles amortize the ~0.35 us/grid-step overhead;
    # keep >= 2 grid steps when rows allow it so v7x's 2 TensorCores both work.
    n8 = _round_up(N, 8)
    if n8 <= tile_n:
        tile_n = _round_up(-(-n8 // 2), 8) if n8 >= 512 else n8
    n_pad = _round_up(N, tile_n)

    # Pad the (tiny) index arrays before the gathers so the embedding streams
    # come out tile-aligned -- no jnp.pad pass over the large streams.
    word_flat = word_idxs.reshape(N)
    char_flat = char_idxs.reshape(N, L)
    if n_pad != N:
        word_flat = jnp.pad(word_flat, (0, n_pad - N))
        char_flat = jnp.pad(char_flat, ((0, n_pad - N), (0, 0)))

    # Embedding lookups (gathers) are glue, done in plain JAX.  Streams stored
    # bf16 (matmul inputs); accumulation inside the kernel stays f32.  The char
    # stream is flattened to (N, L*Cc) so its minor dim is lane-dense.
    # TODO(synk): gathers could move in-kernel (scalar prefetch + pl.Element
    # row gather) once the kernel is HBM-roofline bound.
    word_emb = word_vectors[word_flat].astype(jnp.bfloat16)          # (n_pad, Dw)
    char_emb = char_vectors[char_flat].astype(jnp.bfloat16)          # (n_pad, L, Cc)
    char_emb = char_emb.reshape(n_pad, L * Cc)                       # lane-dense

    # ---- weights pre-packed in the layouts the kernel wants ------------------
    # Block-banded conv weights: W_p (L*Cc, d) = conv_w.reshape(K*Cc, d) at row
    # offset p*Cc, zeros elsewhere; positions paired along the output dim so
    # every conv matmul is (tile_n, L*Cc) @ (L*Cc, 2*d_model).
    cw_flat = params["conv_w"].reshape(CONV_K * Cc, d_model)
    w_pos = [jnp.pad(cw_flat, ((p * Cc, (L - CONV_K - p) * Cc), (0, 0)))
             for p in range(P)]
    if P % 2 == 1:                      # duplicate last position: max(a,a)=a
        w_pos.append(w_pos[-1])
    conv_w = jnp.stack(w_pos).reshape(n_pairs, 2, L * Cc, d_model)
    conv_w = conv_w.transpose(0, 2, 1, 3).reshape(n_pairs, L * Cc, 2 * d_model)
    conv_w = conv_w.astype(jnp.bfloat16)
    conv_b = params["conv_b"].astype(jnp.float32)                    # (1, d)

    rw_word = params["resizer_w"][:Dw].astype(jnp.bfloat16)          # (Dw, d)
    rw_char = params["resizer_w"][Dw:].astype(jnp.bfloat16)          # (d, d)
    hwy_w = jnp.concatenate([params["gate_w"], params["trans_w"]],
                            axis=-1).astype(jnp.bfloat16)            # (2, d, 2d)
    hwy_b = jnp.concatenate([params["gate_b"], params["trans_b"]],
                            axis=-1).astype(jnp.float32)             # (2, 1, 2d)

    def full(*shape):
        return pl.BlockSpec(shape, lambda i: (0,) * len(shape))

    flops_per_row = 2 * (n_pairs * (L * Cc) * (2 * d_model)          # conv
                         + Dw * d_model + d_model * d_model          # resizer
                         + NUM_HWY_LAYERS * d_model * 2 * d_model)   # highway
    cost = pl.CostEstimate(
        flops=flops_per_row * n_pad,
        transcendentals=NUM_HWY_LAYERS * d_model * n_pad,            # sigmoid
        bytes_accessed=(word_emb.size + char_emb.size) * 2           # bf16 in
                       + n_pad * d_model * 4                         # f32 out
                       + (conv_w.size + rw_word.size + rw_char.size
                          + hwy_w.size) * 2)

    out = pl.pallas_call(
        qanet_embedding_kernel,
        out_shape=jax.ShapeDtypeStruct((n_pad, d_model), jnp.float32),
        grid=(n_pad // tile_n,),
        in_specs=[
            pl.BlockSpec((tile_n, Dw), lambda i: (i, 0)),            # word rows
            pl.BlockSpec((tile_n, L * Cc), lambda i: (i, 0)),        # char rows
            full(n_pairs, L * Cc, 2 * d_model),                      # conv W (paired)
            full(1, d_model),                                        # conv b
            full(Dw, d_model),                                       # resizer W (word)
            full(d_model, d_model),                                  # resizer W (char)
            full(NUM_HWY_LAYERS, d_model, 2 * d_model),              # highway W
            full(NUM_HWY_LAYERS, 1, 2 * d_model),                    # highway b
        ],
        out_specs=pl.BlockSpec((tile_n, d_model), lambda i: (i, 0)),
        compiler_params=pltpu.CompilerParams(
            dimension_semantics=("parallel",),
            # 48 MiB leaves headroom on v7x's 64 MiB physical VMEM.
            vmem_limit_bytes=48 * 1024 * 1024),
        cost_estimate=cost,
    )(word_emb, char_emb, conv_w, conv_b, rw_word, rw_char, hwy_w, hwy_b)

    # (n_pad, d) -> (B, S, d) -> (B, d, S), matching PyTorch QANetEmbedding.
    # TODO(synk): fold this transpose (and a bf16 output) into the downstream
    # encoder if it accepts it -- saves a full HBM round trip.
    out = out[:N].reshape(B, S, d_model)
    return jnp.transpose(out, (0, 2, 1))


def qanet_embedding_reference(word_idxs, char_idxs, params):
    """Pure-JAX f32 reference mirroring the PyTorch forward (inference)."""
    wv, cv = params["word_vectors"], params["char_vectors"]
    L = char_idxs.shape[2]
    d_model = params["conv_w"].shape[2]
    we = wv[word_idxs]                                   # (B, S, Dw)
    ce = cv[char_idxs]                                   # (B, S, L, Cc)
    cw, cb = params["conv_w"], params["conv_b"][0]
    P = L - (CONV_K - 1)
    conv = jnp.stack(
        [jnp.einsum("bskc,kcd->bsd", ce[:, :, p:p + CONV_K, :], cw) + cb
         for p in range(P)], axis=2)                     # (B, S, P, d)
    char_feat = jnp.max(jax.nn.relu(conv), axis=2)       # (B, S, d)
    emb = jnp.concatenate([we, char_feat], axis=-1)
    h = emb @ params["resizer_w"]
    for l in range(NUM_HWY_LAYERS):
        g = jax.nn.sigmoid(h @ params["gate_w"][l] + params["gate_b"][l])
        t = jax.nn.relu(h @ params["trans_w"][l] + params["trans_b"][l])
        h = g * t + (1.0 - g) * h
    return jnp.transpose(h, (0, 2, 1))                   # (B, d, S)


def init_params(key, *, vocab_w, vocab_c, Dw, Cc, d_model):
    ks = jax.random.split(key, 9)

    def lin_uniform(k, shape, fan_in):
        bound = 1.0 / (fan_in ** 0.5)
        return jax.random.uniform(k, shape, jnp.float32, -bound, bound)

    conv_fan_in = Cc * 1 * CONV_K
    # TODO(synk): FeedForwardHelper / HighwayEncoder sources were not provided;
    # assumed a bias-free 1x1 channel resizer and the standard BiDAF 2-layer
    # highway (sigmoid gate, relu transform) acting on the channel dimension.
    # NOTE: a real PyTorch Conv2d checkpoint has weight (d, Cc, 1, K); convert
    # with w.squeeze(2).permute(2, 1, 0) to get this (K, Cc, d) layout.
    return dict(
        word_vectors=jax.random.normal(ks[0], (vocab_w, Dw), jnp.float32),
        char_vectors=jax.random.normal(ks[1], (vocab_c, Cc), jnp.float32),
        conv_w=jax.random.normal(ks[2], (CONV_K, Cc, d_model), jnp.float32)
               * (2.0 / conv_fan_in) ** 0.5,
        conv_b=lin_uniform(ks[3], (1, d_model), conv_fan_in),
        resizer_w=lin_uniform(ks[4], (Dw + d_model, d_model), Dw + d_model),
        gate_w=lin_uniform(ks[5], (NUM_HWY_LAYERS, d_model, d_model), d_model),
        gate_b=lin_uniform(ks[6], (NUM_HWY_LAYERS, 1, d_model), d_model),
        trans_w=lin_uniform(ks[7], (NUM_HWY_LAYERS, d_model, d_model), d_model),
        trans_b=lin_uniform(ks[8], (NUM_HWY_LAYERS, 1, d_model), d_model),
    )


if __name__ == "__main__":
    B, S, L = 2, 8, 16            # batch, seq_len, char_limit
    vocab_w, vocab_c = 100, 60    # word / char vocab sizes
    Dw, Cc, d_model = 16, 8, 128  # word emb dim, char emb dim, hidden size

    key = jax.random.PRNGKey(0)
    kp, kw, kc = jax.random.split(key, 3)
    params = init_params(kp, vocab_w=vocab_w, vocab_c=vocab_c,
                         Dw=Dw, Cc=Cc, d_model=d_model)
    word_idxs = jax.random.randint(kw, (B, S), 0, vocab_w, dtype=jnp.int32)
    char_idxs = jax.random.randint(kc, (B, S, L), 0, vocab_c, dtype=jnp.int32)

    out = jax.jit(qanet_embedding)(word_idxs, char_idxs, params)
    out = jax.block_until_ready(out)
    assert out.shape == (B, d_model, S), out.shape

    # Loose tolerance: kernel uses bf16 streams/weights with f32 accumulation.
    ref = qanet_embedding_reference(word_idxs, char_idxs, params)
    max_err = float(jnp.max(jnp.abs(out - ref)))
    assert max_err < 0.1, f"max abs err {max_err}"
    print("KERNEL_OK")
</pallas_src>

<mosaic_0001>
module attributes {stable_mosaic.version = 11 : i64} {
  func.func @qanet_embedding_kernel(%arg0: i32, %arg1: memref<16x16xbf16, #tpu.memory_space<vmem>>, %arg2: memref<16x128xbf16, #tpu.memory_space<vmem>>, %arg3: memref<6x128x256xbf16, #tpu.memory_space<vmem>>, %arg4: memref<1x128xf32, #tpu.memory_space<vmem>>, %arg5: memref<16x128xbf16, #tpu.memory_space<vmem>>, %arg6: memref<128x128xbf16, #tpu.memory_space<vmem>>, %arg7: memref<2x128x256xbf16, #tpu.memory_space<vmem>>, %arg8: memref<2x1x256xf32, #tpu.memory_space<vmem>>, %arg9: memref<16x128xf32, #tpu.memory_space<vmem>>) attributes {dimension_semantics = [#tpu.dimension_semantics<parallel>], iteration_bounds = array<i64: 1>, scalar_prefetch = 0 : i64, scratch_operands = 0 : i64, tpu.core_type = #tpu.core_type<tc>, window_params = [{transform_indices = @transform_0, window_bounds = array<i64: 16, 16>}, {transform_indices = @transform_1, window_bounds = array<i64: 16, 128>}, {pipeline_mode = #tpu.pipeline_mode<synchronous>, transform_indices = @transform_2, window_bounds = array<i64: 6, 128, 256>}, {pipeline_mode = #tpu.pipeline_mode<synchronous>, transform_indices = @transform_3, window_bounds = array<i64: 1, 128>}, {pipeline_mode = #tpu.pipeline_mode<synchronous>, transform_indices = @transform_4, window_bounds = array<i64: 16, 128>}, {pipeline_mode = #tpu.pipeline_mode<synchronous>, transform_indices = @transform_5, window_bounds = array<i64: 128, 128>}, {pipeline_mode = #tpu.pipeline_mode<synchronous>, transform_indices = @transform_6, window_bounds = array<i64: 2, 128, 256>}, {pipeline_mode = #tpu.pipeline_mode<synchronous>, transform_indices = @transform_7, window_bounds = array<i64: 2, 1, 256>}, {transform_indices = @transform_8, window_bounds = array<i64: 16, 128>}]} {
    %c0 = arith.constant 0 : index
    %c0_0 = arith.constant 0 : index
    %0 = vector.load %arg2[%c0, %c0_0] : memref<16x128xbf16, #tpu.memory_space<vmem>>, vector<16x128xbf16>
    %c0_1 = arith.constant 0 : index
    %c0_2 = arith.constant 0 : index
    %c0_3 = arith.constant 0 : index
    %1 = vector.load %arg3[%c0_1, %c0_2, %c0_3] : memref<6x128x256xbf16, #tpu.memory_space<vmem>>, vector<1x128x256xbf16>
    %2 = vector.shape_cast %1 : vector<1x128x256xbf16> to vector<128x256xbf16>
    %cst = arith.constant dense<0.000000e+00> : vector<16x256xf32>
    %3 = tpu.matmul %0, %2, %cst {dimension_numbers = #tpu.dot_dimension_numbers<[1], [0], [0], [1], [0, 0, 1, 1], [], []>} : vector<16x128xbf16>, vector<128x256xbf16>, vector<16x256xf32> -> vector<16x256xf32>
    %4 = vector.extract_strided_slice %3 {offsets = [0, 0], sizes = [16, 128], strides = [1, 1]} : vector<16x256xf32> to vector<16x128xf32>
    %5 = vector.extract_strided_slice %3 {offsets = [0, 128], sizes = [16, 128], strides = [1, 1]} : vector<16x256xf32> to vector<16x128xf32>
    %6 = arith.maximumf %4, %5 : vector<16x128xf32>
    %c1 = arith.constant 1 : index
    %c0_4 = arith.constant 0 : index
    %c0_5 = arith.constant 0 : index
    %7 = vector.load %arg3[%c1, %c0_4, %c0_5] : memref<6x128x256xbf16, #tpu.memory_space<vmem>>, vector<1x128x256xbf16>
    %8 = vector.shape_cast %7 : vector<1x128x256xbf16> to vector<128x256xbf16>
    %cst_6 = arith.constant dense<0.000000e+00> : vector<16x256xf32>
    %9 = tpu.matmul %0, %8, %cst_6 {dimension_numbers = #tpu.dot_dimension_numbers<[1], [0], [0], [1], [0, 0, 1, 1], [], []>} : vector<16x128xbf16>, vector<128x256xbf16>, vector<16x256xf32> -> vector<16x256xf32>
    %10 = vector.extract_strided_slice %9 {offsets = [0, 0], sizes = [16, 128], strides = [1, 1]} : vector<16x256xf32> to vector<16x128xf32>
    %11 = vector.extract_strided_slice %9 {offsets = [0, 128], sizes = [16, 128], strides = [1, 1]} : vector<16x256xf32> to vector<16x128xf32>
    %12 = arith.maximumf %10, %11 : vector<16x128xf32>
    %13 = arith.maximumf %6, %12 : vector<16x128xf32>
    %c2 = arith.constant 2 : index
    %c0_7 = arith.constant 0 : index
    %c0_8 = arith.constant 0 : index
    %14 = vector.load %arg3[%c2, %c0_7, %c0_8] : memref<6x128x256xbf16, #tpu.memory_space<vmem>>, vector<1x128x256xbf16>
    %15 = vector.shape_cast %14 : vector<1x128x256xbf16> to vector<128x256xbf16>
    %cst_9 = arith.constant dense<0.000000e+00> : vector<16x256xf32>
    %16 = tpu.matmul %0, %15, %cst_9 {dimension_numbers = #tpu.dot_dimension_numbers<[1], [0], [0], [1], [0, 0, 1, 1], [], []>} : vector<16x128xbf16>, vector<128x256xbf16>, vector<16x256xf32> -> vector<16x256xf32>
    %17 = vector.extract_strided_slice %16 {offsets = [0, 0], sizes = [16, 128], strides = [1, 1]} : vector<16x256xf32> to vector<16x128xf32>
    %18 = vector.extract_strided_slice %16 {offsets = [0, 128], sizes = [16, 128], strides = [1, 1]} : vector<16x256xf32> to vector<16x128xf32>
    %19 = arith.maximumf %17, %18 : vector<16x128xf32>
    %20 = arith.maximumf %13, %19 : vector<16x128xf32>
    %c3 = arith.constant 3 : index
    %c0_10 = arith.constant 0 : index
    %c0_11 = arith.constant 0 : index
    %21 = vector.load %arg3[%c3, %c0_10, %c0_11] : memref<6x128x256xbf16, #tpu.memory_space<vmem>>, vector<1x128x256xbf16>
    %22 = vector.shape_cast %21 : vector<1x128x256xbf16> to vector<128x256xbf16>
    %cst_12 = arith.constant dense<0.000000e+00> : vector<16x256xf32>
    %23 = tpu.matmul %0, %22, %cst_12 {dimension_numbers = #tpu.dot_dimension_numbers<[1], [0], [0], [1], [0, 0, 1, 1], [], []>} : vector<16x128xbf16>, vector<128x256xbf16>, vector<16x256xf32> -> vector<16x256xf32>
    %24 = vector.extract_strided_slice %23 {offsets = [0, 0], sizes = [16, 128], strides = [1, 1]} : vector<16x256xf32> to vector<16x128xf32>
    %25 = vector.extract_strided_slice %23 {offsets = [0, 128], sizes = [16, 128], strides = [1, 1]} : vector<16x256xf32> to vector<16x128xf32>
    %26 = arith.maximumf %24, %25 : vector<16x128xf32>
    %27 = arith.maximumf %20, %26 : vector<16x128xf32>
    %c4 = arith.constant 4 : index
    %c0_13 = arith.constant 0 : index
    %c0_14 = arith.constant 0 : index
    %28 = vector.load %arg3[%c4, %c0_13, %c0_14] : memref<6x128x256xbf16, #tpu.memory_space<vmem>>, vector<1x128x256xbf16>
    %29 = vector.shape_cast %28 : vector<1x128x256xbf16> to vector<128x256xbf16>
    %cst_15 = arith.constant dense<0.000000e+00> : vector<16x256xf32>
    %30 = tpu.matmul %0, %29, %cst_15 {dimension_numbers = #tpu.dot_dimension_numbers<[1], [0], [0], [1], [0, 0, 1, 1], [], []>} : vector<16x128xbf16>, vector<128x256xbf16>, vector<16x256xf32> -> vector<16x256xf32>
    %31 = vector.extract_strided_slice %30 {offsets = [0, 0], sizes = [16, 128], strides = [1, 1]} : vector<16x256xf32> to vector<16x128xf32>
    %32 = vector.extract_strided_slice %30 {offsets = [0, 128], sizes = [16, 128], strides = [1, 1]} : vector<16x256xf32> to vector<16x128xf32>
    %33 = arith.maximumf %31, %32 : vector<16x128xf32>
    %34 = arith.maximumf %27, %33 : vector<16x128xf32>
    %c5 = arith.constant 5 : index
    %c0_16 = arith.constant 0 : index
    %c0_17 = arith.constant 0 : index
    %35 = vector.load %arg3[%c5, %c0_16, %c0_17] : memref<6x128x256xbf16, #tpu.memory_space<vmem>>, vector<1x128x256xbf16>
    %36 = vector.shape_cast %35 : vector<1x128x256xbf16> to vector<128x256xbf16>
    %cst_18 = arith.constant dense<0.000000e+00> : vector<16x256xf32>
    %37 = tpu.matmul %0, %36, %cst_18 {dimension_numbers = #tpu.dot_dimension_numbers<[1], [0], [0], [1], [0, 0, 1, 1], [], []>} : vector<16x128xbf16>, vector<128x256xbf16>, vector<16x256xf32> -> vector<16x256xf32>
    %38 = vector.extract_strided_slice %37 {offsets = [0, 0], sizes = [16, 128], strides = [1, 1]} : vector<16x256xf32> to vector<16x128xf32>
    %39 = vector.extract_strided_slice %37 {offsets = [0, 128], sizes = [16, 128], strides = [1, 1]} : vector<16x256xf32> to vector<16x128xf32>
    %40 = arith.maximumf %38, %39 : vector<16x128xf32>
    %41 = arith.maximumf %34, %40 : vector<16x128xf32>
    %c0_19 = arith.constant 0 : index
    %c0_20 = arith.constant 0 : index
    %42 = vector.load %arg4[%c0_19, %c0_20] : memref<1x128xf32, #tpu.memory_space<vmem>>, vector<1x128xf32>
    %43 = vector.broadcast %42 : vector<1x128xf32> to vector<16x128xf32>
    %44 = arith.addf %41, %43 : vector<16x128xf32>
    %cst_21 = arith.constant 0.000000e+00 : f32
    %45 = vector.broadcast %cst_21 : f32 to vector<16x128xf32>
    %46 = arith.maximumf %44, %45 : vector<16x128xf32>
    %c0_22 = arith.constant 0 : index
    %c0_23 = arith.constant 0 : index
    %47 = vector.load %arg1[%c0_22, %c0_23] : memref<16x16xbf16, #tpu.memory_space<vmem>>, vector<16x16xbf16>
    %c0_24 = arith.constant 0 : index
    %c0_25 = arith.constant 0 : index
    %48 = vector.load %arg5[%c0_24, %c0_25] : memref<16x128xbf16, #tpu.memory_space<vmem>>, vector<16x128xbf16>
    %cst_26 = arith.constant dense<0.000000e+00> : vector<16x128xf32>
    %49 = tpu.matmul %47, %48, %cst_26 {dimension_numbers = #tpu.dot_dimension_numbers<[1], [0], [0], [1], [0, 0, 1, 1], [], []>} : vector<16x16xbf16>, vector<16x128xbf16>, vector<16x128xf32> -> vector<16x128xf32>
    %50 = arith.truncf %46 : vector<16x128xf32> to vector<16x128xbf16>
    %c0_27 = arith.constant 0 : index
    %c0_28 = arith.constant 0 : index
    %51 = vector.load %arg6[%c0_27, %c0_28] : memref<128x128xbf16, #tpu.memory_space<vmem>>, vector<128x128xbf16>
    %cst_29 = arith.constant dense<0.000000e+00> : vector<16x128xf32>
    %52 = tpu.matmul %50, %51, %cst_29 {dimension_numbers = #tpu.dot_dimension_numbers<[1], [0], [0], [1], [0, 0, 1, 1], [], []>} : vector<16x128xbf16>, vector<128x128xbf16>, vector<16x128xf32> -> vector<16x128xf32>
    %53 = arith.addf %49, %52 : vector<16x128xf32>
    %54 = arith.truncf %53 : vector<16x128xf32> to vector<16x128xbf16>
    %c0_30 = arith.constant 0 : index
    %c0_31 = arith.constant 0 : index
    %c0_32 = arith.constant 0 : index
    %55 = vector.load %arg7[%c0_30, %c0_31, %c0_32] : memref<2x128x256xbf16, #tpu.memory_space<vmem>>, vector<1x128x256xbf16>
    %56 = vector.shape_cast %55 : vector<1x128x256xbf16> to vector<128x256xbf16>
    %cst_33 = arith.constant dense<0.000000e+00> : vector<16x256xf32>
    %57 = tpu.matmul %54, %56, %cst_33 {dimension_numbers = #tpu.dot_dimension_numbers<[1], [0], [0], [1], [0, 0, 1, 1], [], []>} : vector<16x128xbf16>, vector<128x256xbf16>, vector<16x256xf32> -> vector<16x256xf32>
    %c0_34 = arith.constant 0 : index
    %c0_35 = arith.constant 0 : index
    %c0_36 = arith.constant 0 : index
    %58 = vector.load %arg8[%c0_34, %c0_35, %c0_36] : memref<2x1x256xf32, #tpu.memory_space<vmem>>, vector<1x1x256xf32>
    %59 = vector.shape_cast %58 : vector<1x1x256xf32> to vector<1x256xf32>
    %60 = vector.broadcast %59 : vector<1x256xf32> to vector<16x256xf32>
    %61 = arith.addf %57, %60 : vector<16x256xf32>
    %62 = vector.extract_strided_slice %61 {offsets = [0, 0], sizes = [16, 128], strides = [1, 1]} : vector<16x256xf32> to vector<16x128xf32>
    %63 = arith.negf %62 : vector<16x128xf32>
    %64 = math.exp %63 : vector<16x128xf32>
    %cst_37 = arith.constant 1.000000e+00 : f32
    %65 = vector.broadcast %cst_37 : f32 to vector<16x128xf32>
    %66 = arith.addf %65, %64 : vector<16x128xf32>
    %67 = arith.divf %65, %66 : vector<16x128xf32>
    %68 = vector.extract_strided_slice %61 {offsets = [0, 128], sizes = [16, 128], strides = [1, 1]} : vector<16x256xf32> to vector<16x128xf32>
    %cst_38 = arith.constant 0.000000e+00 : f32
    %69 = vector.broadcast %cst_38 : f32 to vector<16x128xf32>
    %70 = arith.maximumf %68, %69 : vector<16x128xf32>
    %71 = arith.mulf %67, %70 : vector<16x128xf32>
    %cst_39 = arith.constant 1.000000e+00 : f32
    %72 = vector.broadcast %cst_39 : f32 to vector<16x128xf32>
    %73 = arith.subf %72, %67 : vector<16x128xf32>
    %74 = arith.mulf %73, %53 : vector<16x128xf32>
    %75 = arith.addf %71, %74 : vector<16x128xf32>
    %76 = arith.truncf %75 : vector<16x128xf32> to vector<16x128xbf16>
    %c1_40 = arith.constant 1 : index
    %c0_41 = arith.constant 0 : index
    %c0_42 = arith.constant 0 : index
    %77 = vector.load %arg7[%c1_40, %c0_41, %c0_42] : memref<2x128x256xbf16, #tpu.memory_space<vmem>>, vector<1x128x256xbf16>
    %78 = vector.shape_cast %77 : vector<1x128x256xbf16> to vector<128x256xbf16>
    %cst_43 = arith.constant dense<0.000000e+00> : vector<16x256xf32>
    %79 = tpu.matmul %76, %78, %cst_43 {dimension_numbers = #tpu.dot_dimension_numbers<[1], [0], [0], [1], [0, 0, 1, 1], [], []>} : vector<16x128xbf16>, vector<128x256xbf16>, vector<16x256xf32> -> vector<16x256xf32>
    %c1_44 = arith.constant 1 : index
    %c0_45 = arith.constant 0 : index
    %c0_46 = arith.constant 0 : index
    %80 = vector.load %arg8[%c1_44, %c0_45, %c0_46] : memref<2x1x256xf32, #tpu.memory_space<vmem>>, vector<1x1x256xf32>
    %81 = vector.shape_cast %80 : vector<1x1x256xf32> to vector<1x256xf32>
    %82 = vector.broadcast %81 : vector<1x256xf32> to vector<16x256xf32>
    %83 = arith.addf %79, %82 : vector<16x256xf32>
    %84 = vector.extract_strided_slice %83 {offsets = [0, 0], sizes = [16, 128], strides = [1, 1]} : vector<16x256xf32> to vector<16x128xf32>
    %85 = arith.negf %84 : vector<16x128xf32>
    %86 = math.exp %85 : vector<16x128xf32>
    %cst_47 = arith.constant 1.000000e+00 : f32
    %87 = vector.broadcast %cst_47 : f32 to vector<16x128xf32>
    %88 = arith.addf %87, %86 : vector<16x128xf32>
    %89 = arith.divf %87, %88 : vector<16x128xf32>
    %90 = vector.extract_strided_slice %83 {offsets = [0, 128], sizes = [16, 128], strides = [1, 1]} : vector<16x256xf32> to vector<16x128xf32>
    %cst_48 = arith.constant 0.000000e+00 : f32
    %91 = vector.broadcast %cst_48 : f32 to vector<16x128xf32>
    %92 = arith.maximumf %90, %91 : vector<16x128xf32>
    %93 = arith.mulf %89, %92 : vector<16x128xf32>
    %cst_49 = arith.constant 1.000000e+00 : f32
    %94 = vector.broadcast %cst_49 : f32 to vector<16x128xf32>
    %95 = arith.subf %94, %89 : vector<16x128xf32>
    %96 = arith.mulf %95, %75 : vector<16x128xf32>
    %97 = arith.addf %93, %96 : vector<16x128xf32>
    %c0_50 = arith.constant 0 : index
    %c0_51 = arith.constant 0 : index
    %98 = vector.load %arg9[%c0_50, %c0_51] : memref<16x128xf32, #tpu.memory_space<vmem>>, vector<16x128xf32>
    tpu.vector_store %arg9[%c0_50, %c0_51], %97 {strides = array<i32>} : memref<16x128xf32, #tpu.memory_space<vmem>>, vector<16x128xf32>,
    return
  }
  func.func @transform_0(%arg0: i32) -> (i32, i32) {
    %c0_i32 = arith.constant 0 : i32
    %c0_i32_0 = arith.constant 0 : i32
    return %arg0, %c0_i32 : i32, i32
  }
  func.func @transform_1(%arg0: i32) -> (i32, i32) {
    %c0_i32 = arith.constant 0 : i32
    %c0_i32_0 = arith.constant 0 : i32
    return %arg0, %c0_i32 : i32, i32
  }
  func.func @transform_2(%arg0: i32) -> (i32, i32, i32) {
    %c0_i32 = arith.constant 0 : i32
    %c0_i32_0 = arith.constant 0 : i32
    %c0_i32_1 = arith.constant 0 : i32
    %c0_i32_2 = arith.constant 0 : i32
    return %c0_i32, %c0_i32_0, %c0_i32_1 : i32, i32, i32
  }
  func.func @transform_3(%arg0: i32) -> (i32, i32) {
    %c0_i32 = arith.constant 0 : i32
    %c0_i32_0 = arith.constant 0 : i32
    %c0_i32_1 = arith.constant 0 : i32
    return %c0_i32, %c0_i32_0 : i32, i32
  }
  func.func @transform_4(%arg0: i32) -> (i32, i32) {
    %c0_i32 = arith.constant 0 : i32
    %c0_i32_0 = arith.constant 0 : i32
    %c0_i32_1 = arith.constant 0 : i32
    return %c0_i32, %c0_i32_0 : i32, i32
  }
  func.func @transform_5(%arg0: i32) -> (i32, i32) {
    %c0_i32 = arith.constant 0 : i32
    %c0_i32_0 = arith.constant 0 : i32
    %c0_i32_1 = arith.constant 0 : i32
    return %c0_i32, %c0_i32_0 : i32, i32
  }
  func.func @transform_6(%arg0: i32) -> (i32, i32, i32) {
    %c0_i32 = arith.constant 0 : i32
    %c0_i32_0 = arith.constant 0 : i32
    %c0_i32_1 = arith.constant 0 : i32
    %c0_i32_2 = arith.constant 0 : i32
    return %c0_i32, %c0_i32_0, %c0_i32_1 : i32, i32, i32
  }
  func.func @transform_7(%arg0: i32) -> (i32, i32, i32) {
    %c0_i32 = arith.constant 0 : i32
    %c0_i32_0 = arith.constant 0 : i32
    %c0_i32_1 = arith.constant 0 : i32
    %c0_i32_2 = arith.constant 0 : i32
    return %c0_i32, %c0_i32_0, %c0_i32_1 : i32, i32, i32
  }
  func.func @transform_8(%arg0: i32) -> (i32, i32) {
    %c0_i32 = arith.constant 0 : i32
    %c0_i32_0 = arith.constant 0 : i32
    return %arg0, %c0_i32 : i32, i32
  }
}

</mosaic_0001>

<llo_original>
// kernel: qanet_embedding.1
$region0: #{qanet_embedding.1}
  #allocation0 [shape = 'u32[]', space=smem, size = 0x4, offset = 0x4, fixed_abs, tag = 'smem constant byte address 0x4 - core index']
  #allocation1 [shape = 'u32[72,128]{1,0:T(1,128)}', space=vmem, size = 0x9000, scoped, tag = 'internal scratch']
  %s0 = inlined_call_operand.vmem [shape: bf16[16,16], index: 0, kind: input, shape index: {}]
  %s1 = inlined_call_operand.vmem [shape: bf16[16,128], index: 1, kind: input, shape index: {}]
  %s2 = inlined_call_operand.vmem [shape: bf16[6,128,256], index: 2, kind: input, shape index: {}]
  %s3 = inlined_call_operand.vmem [shape: f32[1,128], index: 3, kind: input, shape index: {}]
  %s4 = inlined_call_operand.vmem [shape: bf16[16,128], index: 4, kind: input, shape index: {}]
  %s5 = inlined_call_operand.vmem [shape: bf16[128,128], index: 5, kind: input, shape index: {}]
  %s6 = inlined_call_operand.vmem [shape: bf16[2,128,256], index: 6, kind: input, shape index: {}]
  %s7 = inlined_call_operand.vmem [shape: f32[2,1,256], index: 7, kind: input, shape index: {}]
  %s8 = inlined_call_operand.hbm [shape: f32[16,128], index: 8, kind: output, shape index: {}]
  %s9 = sld [smem:[#allocation0]]
  $region42: #{qanet_embedding.1} parent=0
    _
  %s11 = ssub.s32 1, %s9
  %s12 = scalar_select 0, %s11, %s9
  $region1: #{qanet_embedding.1} parent=0
    #allocation2 [shape = 'u8[8192]{0}', space=vmem, size = 0x2000, scoped, tag = 'output window, operand 0, single buffered']
    #allocation3 [shape = 's32[1]{0}', space=sflag, size = 0x4, scoped, tag = 'scoped memory for qanet_embedding.1']
    %13 = vsyncpa [#allocation3], 0
    // Predicated region
    $region2: #{qanet_embedding.1} parent=1 // pred_check
      _
    $region3: #{qanet_embedding.1} parent=1 // pred_check_branch
      %15 = sbr.rel (0) target = $region5
    $region4: #{qanet_embedding.1} parent=1 // pred_region
      _
    $region5: #{qanet_embedding.1} parent=1 // pred_fallthru
      _
    // Predicated region
    $region6: #{qanet_embedding.1} parent=1 // pred_check
      _
    $region7: #{qanet_embedding.1} parent=1 // pred_check_branch
      %17 = sbr.rel (0) target = $region9
    $region8: #{qanet_embedding.1} parent=1 // pred_region
      _
    $region9: #{qanet_embedding.1} parent=1 // pred_fallthru
      _
    // Predicated region
    $region10: #{qanet_embedding.1} parent=1 // pred_check
      _
    $region11: #{qanet_embedding.1} parent=1 // pred_check_branch
      %19 = sbr.rel (0) target = $region13
    $region12: #{qanet_embedding.1} parent=1 // pred_region
      _
    $region13: #{qanet_embedding.1} parent=1 // pred_fallthru
      _
    // Predicated region
    $region14: #{qanet_embedding.1} parent=1 // pred_check
      _
    $region15: #{qanet_embedding.1} parent=1 // pred_check_branch
      %21 = sbr.rel (0) target = $region17
    $region16: #{qanet_embedding.1} parent=1 // pred_region
      _
    $region17: #{qanet_embedding.1} parent=1 // pred_fallthru
      _
    // Predicated region
    $region18: #{qanet_embedding.1} parent=1 // pred_check
      _
    $region19: #{qanet_embedding.1} parent=1 // pred_check_branch
      %23 = sbr.rel (0) target = $region21
    $region20: #{qanet_embedding.1} parent=1 // pred_region
      _
    $region21: #{qanet_embedding.1} parent=1 // pred_fallthru
      _
    // Predicated region
    $region22: #{qanet_embedding.1} parent=1 // pred_check
      _
    $region23: #{qanet_embedding.1} parent=1 // pred_check_branch
      %25 = sbr.rel (0) target = $region25
    $region24: #{qanet_embedding.1} parent=1 // pred_region
      _
    $region25: #{qanet_embedding.1} parent=1 // pred_fallthru
      _
    // Predicated region
    $region26: #{qanet_embedding.1} parent=1 // pred_check
      _
    $region27: #{qanet_embedding.1} parent=1 // pred_check_branch
      %27 = sbr.rel (0) target = $region29
    $region28: #{qanet_embedding.1} parent=1 // pred_region
      _
    $region29: #{qanet_embedding.1} parent=1 // pred_fallthru
      _
    // Predicated region
    $region30: #{qanet_embedding.1} parent=1 // pred_check
      _
    $region31: #{qanet_embedding.1} parent=1 // pred_check_branch
      %29 = sbr.rel (0) target = $region33
    $region32: #{qanet_embedding.1} parent=1 // pred_region
      _
    $region33: #{qanet_embedding.1} parent=1 // pred_fallthru
      _
    %v31 = vld [vmem:[%s1] sm:$0xf]
    %v32 = vld [vmem:[%s1 + $0x4] sm:$0xf]
    %v33 = vld [vmem:[%s2] sm:$0xff]
    %v34 = vld [vmem:[%s2 + $0x8] sm:$0xff]
    %v35 = vld [vmem:[%s2 + $0x10] sm:$0xff]
    %v36 = vld [vmem:[%s2 + $0x18] sm:$0xff]
    %v37 = vld [vmem:[%s2 + $0x20] sm:$0xff]
    %v38 = vld [vmem:[%s2 + $0x28] sm:$0xff]
    %v39 = vld [vmem:[%s2 + $0x30] sm:$0xff]
    %v40 = vld [vmem:[%s2 + $0x38] sm:$0xff]
    %v41 = vld [vmem:[%s2 + $0x40] sm:$0xff]
    %v42 = vld [vmem:[%s2 + $0x48] sm:$0xff]
    %v43 = vld [vmem:[%s2 + $0x50] sm:$0xff]
    %v44 = vld [vmem:[%s2 + $0x58] sm:$0xff]
    %v45 = vld [vmem:[%s2 + $0x60] sm:$0xff]
    %v46 = vld [vmem:[%s2 + $0x68] sm:$0xff]
    %v47 = vld [vmem:[%s2 + $0x70] sm:$0xff]
    %v48 = vld [vmem:[%s2 + $0x78] sm:$0xff]
    %v51 = vunpack.c.l.b16 %v31
    %v52 = vunpack.c.l.b16 %v32
    %v53 = vpack.c.b16 %v52, %v51
    %v71 = vunpack.c.l.b16 %v33
    %v72 = vunpack.c.h.b16 %v33
    %v73 = vunpack.c.l.b16 %v34
    %v74 = vunpack.c.h.b16 %v34
    %v75 = vunpack.c.l.b16 %v35
    %v76 = vunpack.c.h.b16 %v35
    %v77 = vunpack.c.l.b16 %v36
    %v78 = vunpack.c.h.b16 %v36
    %v79 = vunpack.c.l.b16 %v37
    %v80 = vunpack.c.h.b16 %v37
    %v81 = vunpack.c.l.b16 %v38
    %v82 = vunpack.c.h.b16 %v38
    %v83 = vunpack.c.l.b16 %v39
    %v84 = vunpack.c.h.b16 %v39
    %v85 = vunpack.c.l.b16 %v40
    %v86 = vunpack.c.h.b16 %v40
    %v87 = vunpack.c.l.b16 %v41
    %v88 = vunpack.c.h.b16 %v41
    %v89 = vunpack.c.l.b16 %v42
    %v90 = vunpack.c.h.b16 %v42
    %v91 = vunpack.c.l.b16 %v43
    %v92 = vunpack.c.h.b16 %v43
    %v93 = vunpack.c.l.b16 %v44
    %v94 = vunpack.c.h.b16 %v44
    %v95 = vunpack.c.l.b16 %v45
    %v96 = vunpack.c.h.b16 %v45
    %v97 = vunpack.c.l.b16 %v46
    %v98 = vunpack.c.h.b16 %v46
    %v99 = vunpack.c.l.b16 %v47
    %v100 = vunpack.c.h.b16 %v47
    %v101 = vunpack.c.l.b16 %v48
    %v102 = vunpack.c.h.b16 %v48
    %v103 = vpack.c.b16 %v73, %v71
    %v104 = vpack.c.b16 %v74, %v72
    %v105 = vpack.c.b16 %v77, %v75
    %v106 = vpack.c.b16 %v78, %v76
    %v107 = vpack.c.b16 %v81, %v79
    %v108 = vpack.c.b16 %v82, %v80
    %v109 = vpack.c.b16 %v85, %v83
    %v110 = vpack.c.b16 %v86, %v84
    %v111 = vpack.c.b16 %v89, %v87
    %v112 = vpack.c.b16 %v90, %v88
    %v113 = vpack.c.b16 %v93, %v91
    %v114 = vpack.c.b16 %v94, %v92
    %v115 = vpack.c.b16 %v97, %v95
    %v116 = vpack.c.b16 %v98, %v96
    %v117 = vpack.c.b16 %v101, %v99
    %v118 = vpack.c.b16 %v102, %v100
    %135 = vmatpush.bf16.msra.mxu0 %v117
    %136 = vmatpush.bf16.msra.mxu0 %v115
    %137 = vmatpush.bf16.msra.mxu0 %v113
    %138 = vmatpush.bf16.msra.mxu0 %v111
    %139 = vmatpush.bf16.msra.mxu0 %v109
    %140 = vmatpush.bf16.msra.mxu0 %v107
    %141 = vmatpush.bf16.msra.mxu0 %v105
    %142 = vmatpush.bf16.msra.mxu0 %v103
    %143 = vmatmul.bf16.gmra.mxu0 %v53
    %v144 = vpop.f32.mrf.mxu0
    %v145 = vadd.f32 0.0, %v144
    %v146 = vpop.f32.mrf.mxu0
    %v147 = vadd.f32 0.0, %v146
    %148 = vdwg.mxu0
    %149 = vmatpush.bf16.msra.mxu0 %v118
    %150 = vmatpush.bf16.msra.mxu0 %v116
    %151 = vmatpush.bf16.msra.mxu0 %v114
    %152 = vmatpush.bf16.msra.mxu0 %v112
    %153 = vmatpush.bf16.msra.mxu0 %v110
    %154 = vmatpush.bf16.msra.mxu0 %v108
    %155 = vmatpush.bf16.msra.mxu0 %v106
    %156 = vmatpush.bf16.msra.mxu0 %v104
    %157 = vmatmul.bf16.gmra.mxu0 %v53
    %v158 = vpop.f32.mrf.mxu0
    %v159 = vadd.f32 0.0, %v158
    %v160 = vpop.f32.mrf.mxu0
    %v161 = vadd.f32 0.0, %v160
    %162 = vdwg.mxu0
    %v163 = vmax.f32 %v145, %v159
    %v164 = vmax.f32 %v147, %v161
    %s165 = scalar_lea.vmem %s2, 128
    %v166 = vld [vmem:[%s165] sm:$0xff]
    %v167 = vld [vmem:[%s165 + $0x8] sm:$0xff]
    %v168 = vld [vmem:[%s165 + $0x10] sm:$0xff]
    %v169 = vld [vmem:[%s165 + $0x18] sm:$0xff]
    %v170 = vld [vmem:[%s165 + $0x20] sm:$0xff]
    %v171 = vld [vmem:[%s165 + $0x28] sm:$0xff]
    %v172 = vld [vmem:[%s165 + $0x30] sm:$0xff]
    %v173 = vld [vmem:[%s165 + $0x38] sm:$0xff]
    %v174 = vld [vmem:[%s165 + $0x40] sm:$0xff]
    %v175 = vld [vmem:[%s165 + $0x48] sm:$0xff]
    %v176 = vld [vmem:[%s165 + $0x50] sm:$0xff]
    %v177 = vld [vmem:[%s165 + $0x58] sm:$0xff]
    %v178 = vld [vmem:[%s165 + $0x60] sm:$0xff]
    %v179 = vld [vmem:[%s165 + $0x68] sm:$0xff]
    %v180 = vld [vmem:[%s165 + $0x70] sm:$0xff]
    %v181 = vld [vmem:[%s165 + $0x78] sm:$0xff]
    %v198 = vunpack.c.l.b16 %v166
    %v199 = vunpack.c.h.b16 %v166
    %v200 = vunpack.c.l.b16 %v167
    %v201 = vunpack.c.h.b16 %v167
    %v202 = vunpack.c.l.b16 %v168
    %v203 = vunpack.c.h.b16 %v168
    %v204 = vunpack.c.l.b16 %v169
    %v205 = vunpack.c.h.b16 %v169
    %v206 = vunpack.c.l.b16 %v170
    %v207 = vunpack.c.h.b16 %v170
    %v208 = vunpack.c.l.b16 %v171
    %v209 = vunpack.c.h.b16 %v171
    %v210 = vunpack.c.l.b16 %v172
    %v211 = vunpack.c.h.b16 %v172
    %v212 = vunpack.c.l.b16 %v173
    %v213 = vunpack.c.h.b16 %v173
    %v214 = vunpack.c.l.b16 %v174
    %v215 = vunpack.c.h.b16 %v174
    %v216 = vunpack.c.l.b16 %v175
    %v217 = vunpack.c.h.b16 %v175
    %v218 = vunpack.c.l.b16 %v176
    %v219 = vunpack.c.h.b16 %v176
    %v220 = vunpack.c.l.b16 %v177
    %v221 = vunpack.c.h.b16 %v177
    %v222 = vunpack.c.l.b16 %v178
    %v223 = vunpack.c.h.b16 %v178
    %v224 = vunpack.c.l.b16 %v179
    %v225 = vunpack.c.h.b16 %v179
    %v226 = vunpack.c.l.b16 %v180
    %v227 = vunpack.c.h.b16 %v180
    %v228 = vunpack.c.l.b16 %v181
    %v229 = vunpack.c.h.b16 %v181
    %v230 = vpack.c.b16 %v200, %v198
    %v231 = vpack.c.b16 %v201, %v199
    %v232 = vpack.c.b16 %v204, %v202
    %v233 = vpack.c.b16 %v205, %v203
    %v234 = vpack.c.b16 %v208, %v206
    %v235 = vpack.c.b16 %v209, %v207
    %v236 = vpack.c.b16 %v212, %v210
    %v237 = vpack.c.b16 %v213, %v211
    %v238 = vpack.c.b16 %v216, %v214
    %v239 = vpack.c.b16 %v217, %v215
    %v240 = vpack.c.b16 %v220, %v218
    %v241 = vpack.c.b16 %v221, %v219
    %v242 = vpack.c.b16 %v224, %v222
    %v243 = vpack.c.b16 %v225, %v223
    %v244 = vpack.c.b16 %v228, %v226
    %v245 = vpack.c.b16 %v229, %v227
    %262 = vmatpush.bf16.msra.mxu0 %v244
    %263 = vmatpush.bf16.msra.mxu0 %v242
    %264 = vmatpush.bf16.msra.mxu0 %v240
    %265 = vmatpush.bf16.msra.mxu0 %v238
    %266 = vmatpush.bf16.msra.mxu0 %v236
    %267 = vmatpush.bf16.msra.mxu0 %v234
    %268 = vmatpush.bf16.msra.mxu0 %v232
    %269 = vmatpush.bf16.msra.mxu0 %v230
    %270 = vmatmul.bf16.gmra.mxu0 %v53
    %v271 = vpop.f32.mrf.mxu0
    %v272 = vadd.f32 0.0, %v271
    %v273 = vpop.f32.mrf.mxu0
    %v274 = vadd.f32 0.0, %v273
    %275 = vdwg.mxu0
    %276 = vmatpush.bf16.msra.mxu0 %v245
    %277 = vmatpush.bf16.msra.mxu0 %v243
    %278 = vmatpush.bf16.msra.mxu0 %v241
    %279 = vmatpush.bf16.msra.mxu0 %v239
    %280 = vmatpush.bf16.msra.mxu0 %v237
    %281 = vmatpush.bf16.msra.mxu0 %v235
    %282 = vmatpush.bf16.msra.mxu0 %v233
    %283 = vmatpush.bf16.msra.mxu0 %v231
    %284 = vmatmul.bf16.gmra.mxu0 %v53
    %v285 = vpop.f32.mrf.mxu0
    %v286 = vadd.f32 0.0, %v285
    %v287 = vpop.f32.mrf.mxu0
    %v288 = vadd.f32 0.0, %v287
    %289 = vdwg.mxu0
    %v290 = vmax.f32 %v272, %v286
    %v291 = vmax.f32 %v274, %v288
    %v292 = vmax.f32 %v163, %v290
    %v293 = vmax.f32 %v164, %v291
    %s294 = scalar_lea.vmem %s2, 256
    %v295 = vld [vmem:[%s294] sm:$0xff]
    %v296 = vld [vmem:[%s294 + $0x8] sm:$0xff]
    %v297 = vld [vmem:[%s294 + $0x10] sm:$0xff]
    %v298 = vld [vmem:[%s294 + $0x18] sm:$0xff]
    %v299 = vld [vmem:[%s294 + $0x20] sm:$0xff]
    %v300 = vld [vmem:[%s294 + $0x28] sm:$0xff]
    %v301 = vld [vmem:[%s294 + $0x30] sm:$0xff]
    %v302 = vld [vmem:[%s294 + $0x38] sm:$0xff]
    %v303 = vld [vmem:[%s294 + $0x40] sm:$0xff]
    %v304 = vld [vmem:[%s294 + $0x48] sm:$0xff]
    %v305 = vld [vmem:[%s294 + $0x50] sm:$0xff]
    %v306 = vld [vmem:[%s294 + $0x58] sm:$0xff]
    %v307 = vld [vmem:[%s294 + $0x60] sm:$0xff]
    %v308 = vld [vmem:[%s294 + $0x68] sm:$0xff]
    %v309 = vld [vmem:[%s294 + $0x70] sm:$0xff]
    %v310 = vld [vmem:[%s294 + $0x78] sm:$0xff]
    %v327 = vunpack.c.l.b16 %v295
    %v328 = vunpack.c.h.b16 %v295
    %v329 = vunpack.c.l.b16 %v296
    %v330 = vunpack.c.h.b16 %v296
    %v331 = vunpack.c.l.b16 %v297
    %v332 = vunpack.c.h.b16 %v297
    %v333 = vunpack.c.l.b16 %v298
    %v334 = vunpack.c.h.b16 %v298
    %v335 = vunpack.c.l.b16 %v299
    %v336 = vunpack.c.h.b16 %v299
    %v337 = vunpack.c.l.b16 %v300
    %v338 = vunpack.c.h.b16 %v300
    %v339 = vunpack.c.l.b16 %v301
    %v340 = vunpack.c.h.b16 %v301
    %v341 = vunpack.c.l.b16 %v302
    %v342 = vunpack.c.h.b16 %v302
    %v343 = vunpack.c.l.b16 %v303
    %v344 = vunpack.c.h.b16 %v303
    %v345 = vunpack.c.l.b16 %v304
    %v346 = vunpack.c.h.b16 %v304
    %v347 = vunpack.c.l.b16 %v305
    %v348 = vunpack.c.h.b16 %v305
    %v349 = vunpack.c.l.b16 %v306
    %v350 = vunpack.c.h.b16 %v306
    %v351 = vunpack.c.l.b16 %v307
    %v352 = vunpack.c.h.b16 %v307
    %v353 = vunpack.c.l.b16 %v308
    %v354 = vunpack.c.h.b16 %v308
    %v355 = vunpack.c.l.b16 %v309
    %v356 = vunpack.c.h.b16 %v309
    %v357 = vunpack.c.l.b16 %v310
    %v358 = vunpack.c.h.b16 %v310
    %v359 = vpack.c.b16 %v329, %v327
    %v360 = vpack.c.b16 %v330, %v328
    %v361 = vpack.c.b16 %v333, %v331
    %v362 = vpack.c.b16 %v334, %v332
    %v363 = vpack.c.b16 %v337, %v335
    %v364 = vpack.c.b16 %v338, %v336
    %v365 = vpack.c.b16 %v341, %v339
    %v366 = vpack.c.b16 %v342, %v340
    %v367 = vpack.c.b16 %v345, %v343
    %v368 = vpack.c.b16 %v346, %v344
    %v369 = vpack.c.b16 %v349, %v347
    %v370 = vpack.c.b16 %v350, %v348
    %v371 = vpack.c.b16 %v353, %v351
    %v372 = vpack.c.b16 %v354, %v352
    %v373 = vpack.c.b16 %v357, %v355
    %v374 = vpack.c.b16 %v358, %v356
    %391 = vmatpush.bf16.msra.mxu0 %v373
    %392 = vmatpush.bf16.msra.mxu0 %v371
    %393 = vmatpush.bf16.msra.mxu0 %v369
    %394 = vmatpush.bf16.msra.mxu0 %v367
    %395 = vmatpush.bf16.msra.mxu0 %v365
    %396 = vmatpush.bf16.msra.mxu0 %v363
    %397 = vmatpush.bf16.msra.mxu0 %v361
    %398 = vmatpush.bf16.msra.mxu0 %v359
    %399 = vmatmul.bf16.gmra.mxu0 %v53
    %v400 = vpop.f32.mrf.mxu0
    %v401 = vadd.f32 0.0, %v400
    %v402 = vpop.f32.mrf.mxu0
    %v403 = vadd.f32 0.0, %v402
    %404 = vdwg.mxu0
    %405 = vmatpush.bf16.msra.mxu0 %v374
    %406 = vmatpush.bf16.msra.mxu0 %v372
    %407 = vmatpush.bf16.msra.mxu0 %v370
    %408 = vmatpush.bf16.msra.mxu0 %v368
    %409 = vmatpush.bf16.msra.mxu0 %v366
    %410 = vmatpush.bf16.msra.mxu0 %v364
    %411 = vmatpush.bf16.msra.mxu0 %v362
    %412 = vmatpush.bf16.msra.mxu0 %v360
    %413 = vmatmul.bf16.gmra.mxu0 %v53
    %v414 = vpop.f32.mrf.mxu0
    %v415 = vadd.f32 0.0, %v414
    %v416 = vpop.f32.mrf.mxu0
    %v417 = vadd.f32 0.0, %v416
    %418 = vdwg.mxu0
    %v419 = vmax.f32 %v401, %v415
    %v420 = vmax.f32 %v403, %v417
    %v421 = vmax.f32 %v292, %v419
    %v422 = vmax.f32 %v293, %v420
    %s423 = scalar_lea.vmem %s2, 384
    %v424 = vld [vmem:[%s423] sm:$0xff]
    %v425 = vld [vmem:[%s423 + $0x8] sm:$0xff]
    %v426 = vld [vmem:[%s423 + $0x10] sm:$0xff]
    %v427 = vld [vmem:[%s423 + $0x18] sm:$0xff]
    %v428 = vld [vmem:[%s423 + $0x20] sm:$0xff]
    %v429 = vld [vmem:[%s423 + $0x28] sm:$0xff]
    %v430 = vld [vmem:[%s423 + $0x30] sm:$0xff]
    %v431 = vld [vmem:[%s423 + $0x38] sm:$0xff]
    %v432 = vld [vmem:[%s423 + $0x40] sm:$0xff]
    %v433 = vld [vmem:[%s423 + $0x48] sm:$0xff]
    %v434 = vld [vmem:[%s423 + $0x50] sm:$0xff]
    %v435 = vld [vmem:[%s423 + $0x58] sm:$0xff]
    %v436 = vld [vmem:[%s423 + $0x60] sm:$0xff]
    %v437 = vld [vmem:[%s423 + $0x68] sm:$0xff]
    %v438 = vld [vmem:[%s423 + $0x70] sm:$0xff]
    %v439 = vld [vmem:[%s423 + $0x78] sm:$0xff]
    %v456 = vunpack.c.l.b16 %v424
    %v457 = vunpack.c.h.b16 %v424
    %v458 = vunpack.c.l.b16 %v425
    %v459 = vunpack.c.h.b16 %v425
    %v460 = vunpack.c.l.b16 %v426
    %v461 = vunpack.c.h.b16 %v426
    %v462 = vunpack.c.l.b16 %v427
    %v463 = vunpack.c.h.b16 %v427
    %v464 = vunpack.c.l.b16 %v428
    %v465 = vunpack.c.h.b16 %v428
    %v466 = vunpack.c.l.b16 %v429
    %v467 = vunpack.c.h.b16 %v429
    %v468 = vunpack.c.l.b16 %v430
    %v469 = vunpack.c.h.b16 %v430
    %v470 = vunpack.c.l.b16 %v431
    %v471 = vunpack.c.h.b16 %v431
    %v472 = vunpack.c.l.b16 %v432
    %v473 = vunpack.c.h.b16 %v432
    %v474 = vunpack.c.l.b16 %v433
    %v475 = vunpack.c.h.b16 %v433
    %v476 = vunpack.c.l.b16 %v434
    %v477 = vunpack.c.h.b16 %v434
    %v478 = vunpack.c.l.b16 %v435
    %v479 = vunpack.c.h.b16 %v435
    %v480 = vunpack.c.l.b16 %v436
    %v481 = vunpack.c.h.b16 %v436
    %v482 = vunpack.c.l.b16 %v437
    %v483 = vunpack.c.h.b16 %v437
    %v484 = vunpack.c.l.b16 %v438
    %v485 = vunpack.c.h.b16 %v438
    %v486 = vunpack.c.l.b16 %v439
    %v487 = vunpack.c.h.b16 %v439
    %v488 = vpack.c.b16 %v458, %v456
    %v489 = vpack.c.b16 %v459, %v457
    %v490 = vpack.c.b16 %v462, %v460
    %v491 = vpack.c.b16 %v463, %v461
    %v492 = vpack.c.b16 %v466, %v464
    %v493 = vpack.c.b16 %v467, %v465
    %v494 = vpack.c.b16 %v470, %v468
    %v495 = vpack.c.b16 %v471, %v469
    %v496 = vpack.c.b16 %v474, %v472
    %v497 = vpack.c.b16 %v475, %v473
    %v498 = vpack.c.b16 %v478, %v476
    %v499 = vpack.c.b16 %v479, %v477
    %v500 = vpack.c.b16 %v482, %v480
    %v501 = vpack.c.b16 %v483, %v481
    %v502 = vpack.c.b16 %v486, %v484
    %v503 = vpack.c.b16 %v487, %v485
    %520 = vmatpush.bf16.msra.mxu0 %v502
    %521 = vmatpush.bf16.msra.mxu0 %v500
    %522 = vmatpush.bf16.msra.mxu0 %v498
    %523 = vmatpush.bf16.msra.mxu0 %v496
    %524 = vmatpush.bf16.msra.mxu0 %v494
    %525 = vmatpush.bf16.msra.mxu0 %v492
    %526 = vmatpush.bf16.msra.mxu0 %v490
    %527 = vmatpush.bf16.msra.mxu0 %v488
    %528 = vmatmul.bf16.gmra.mxu0 %v53
    %v529 = vpop.f32.mrf.mxu0
    %v530 = vadd.f32 0.0, %v529
    %v531 = vpop.f32.mrf.mxu0
    %v532 = vadd.f32 0.0, %v531
    %533 = vdwg.mxu0
    %534 = vmatpush.bf16.msra.mxu0 %v503
    %535 = vmatpush.bf16.msra.mxu0 %v501
    %536 = vmatpush.bf16.msra.mxu0 %v499
    %537 = vmatpush.bf16.msra.mxu0 %v497
    %538 = vmatpush.bf16.msra.mxu0 %v495
    %539 = vmatpush.bf16.msra.mxu0 %v493
    %540 = vmatpush.bf16.msra.mxu0 %v491
    %541 = vmatpush.bf16.msra.mxu0 %v489
    %542 = vmatmul.bf16.gmra.mxu0 %v53
    %v543 = vpop.f32.mrf.mxu0
    %v544 = vadd.f32 0.0, %v543
    %v545 = vpop.f32.mrf.mxu0
    %v546 = vadd.f32 0.0, %v545
    %547 = vdwg.mxu0
    %v548 = vmax.f32 %v530, %v544
    %v549 = vmax.f32 %v532, %v546
    %v550 = vmax.f32 %v421, %v548
    %v551 = vmax.f32 %v422, %v549
    %s552 = scalar_lea.vmem %s2, 512
    %v553 = vld [vmem:[%s552] sm:$0xff]
    %v554 = vld [vmem:[%s552 + $0x8] sm:$0xff]
    %v555 = vld [vmem:[%s552 + $0x10] sm:$0xff]
    %v556 = vld [vmem:[%s552 + $0x18] sm:$0xff]
    %v557 = vld [vmem:[%s552 + $0x20] sm:$0xff]
    %v558 = vld [vmem:[%s552 + $0x28] sm:$0xff]
    %v559 = vld [vmem:[%s552 + $0x30] sm:$0xff]
    %v560 = vld [vmem:[%s552 + $0x38] sm:$0xff]
    %v561 = vld [vmem:[%s552 + $0x40] sm:$0xff]
    %v562 = vld [vmem:[%s552 + $0x48] sm:$0xff]
    %v563 = vld [vmem:[%s552 + $0x50] sm:$0xff]
    %v564 = vld [vmem:[%s552 + $0x58] sm:$0xff]
    %v565 = vld [vmem:[%s552 + $0x60] sm:$0xff]
    %v566 = vld [vmem:[%s552 + $0x68] sm:$0xff]
    %v567 = vld [vmem:[%s552 + $0x70] sm:$0xff]
    %v568 = vld [vmem:[%s552 + $0x78] sm:$0xff]
    %v585 = vunpack.c.l.b16 %v553
    %v586 = vunpack.c.h.b16 %v553
    %v587 = vunpack.c.l.b16 %v554
    %v588 = vunpack.c.h.b16 %v554
    %v589 = vunpack.c.l.b16 %v555
    %v590 = vunpack.c.h.b16 %v555
    %v591 = vunpack.c.l.b16 %v556
    %v592 = vunpack.c.h.b16 %v556
    %v593 = vunpack.c.l.b16 %v557
    %v594 = vunpack.c.h.b16 %v557
    %v595 = vunpack.c.l.b16 %v558
    %v596 = vunpack.c.h.b16 %v558
    %v597 = vunpack.c.l.b16 %v559
    %v598 = vunpack.c.h.b16 %v559
    %v599 = vunpack.c.l.b16 %v560
    %v600 = vunpack.c.h.b16 %v560
    %v601 = vunpack.c.l.b16 %v561
    %v602 = vunpack.c.h.b16 %v561
    %v603 = vunpack.c.l.b16 %v562
    %v604 = vunpack.c.h.b16 %v562
    %v605 = vunpack.c.l.b16 %v563
    %v606 = vunpack.c.h.b16 %v563
    %v607 = vunpack.c.l.b16 %v564
    %v608 = vunpack.c.h.b16 %v564
    %v609 = vunpack.c.l.b16 %v565
    %v610 = vunpack.c.h.b16 %v565
    %v611 = vunpack.c.l.b16 %v566
    %v612 = vunpack.c.h.b16 %v566
    %v613 = vunpack.c.l.b16 %v567
    %v614 = vunpack.c.h.b16 %v567
    %v615 = vunpack.c.l.b16 %v568
    %v616 = vunpack.c.h.b16 %v568
    %v617 = vpack.c.b16 %v587, %v585
    %v618 = vpack.c.b16 %v588, %v586
    %v619 = vpack.c.b16 %v591, %v589
    %v620 = vpack.c.b16 %v592, %v590
    %v621 = vpack.c.b16 %v595, %v593
    %v622 = vpack.c.b16 %v596, %v594
    %v623 = vpack.c.b16 %v599, %v597
    %v624 = vpack.c.b16 %v600, %v598
    %v625 = vpack.c.b16 %v603, %v601
    %v626 = vpack.c.b16 %v604, %v602
    %v627 = vpack.c.b16 %v607, %v605
    %v628 = vpack.c.b16 %v608, %v606
    %v629 = vpack.c.b16 %v611, %v609
    %v630 = vpack.c.b16 %v612, %v610
    %v631 = vpack.c.b16 %v615, %v613
    %v632 = vpack.c.b16 %v616, %v614
    %649 = vmatpush.bf16.msra.mxu0 %v631
    %650 = vmatpush.bf16.msra.mxu0 %v629
    %651 = vmatpush.bf16.msra.mxu0 %v627
    %652 = vmatpush.bf16.msra.mxu0 %v625
    %653 = vmatpush.bf16.msra.mxu0 %v623
    %654 = vmatpush.bf16.msra.mxu0 %v621
    %655 = vmatpush.bf16.msra.mxu0 %v619
    %656 = vmatpush.bf16.msra.mxu0 %v617
    %657 = vmatmul.bf16.gmra.mxu0 %v53
    %v658 = vpop.f32.mrf.mxu0
    %v659 = vadd.f32 0.0, %v658
    %v660 = vpop.f32.mrf.mxu0
    %v661 = vadd.f32 0.0, %v660
    %662 = vdwg.mxu0
    %663 = vmatpush.bf16.msra.mxu0 %v632
    %664 = vmatpush.bf16.msra.mxu0 %v630
    %665 = vmatpush.bf16.msra.mxu0 %v628
    %666 = vmatpush.bf16.msra.mxu0 %v626
    %667 = vmatpush.bf16.msra.mxu0 %v624
    %668 = vmatpush.bf16.msra.mxu0 %v622
    %669 = vmatpush.bf16.msra.mxu0 %v620
    %670 = vmatpush.bf16.msra.mxu0 %v618
    %671 = vmatmul.bf16.gmra.mxu0 %v53
    %v672 = vpop.f32.mrf.mxu0
    %v673 = vadd.f32 0.0, %v672
    %v674 = vpop.f32.mrf.mxu0
    %v675 = vadd.f32 0.0, %v674
    %676 = vdwg.mxu0
    %v677 = vmax.f32 %v659, %v673
    %v678 = vmax.f32 %v661, %v675
    %v679 = vmax.f32 %v550, %v677
    %v680 = vmax.f32 %v551, %v678
    %s681 = scalar_lea.vmem %s2, 640
    %v682 = vld [vmem:[%s681] sm:$0xff]
    %v683 = vld [vmem:[%s681 + $0x8] sm:$0xff]
    %v684 = vld [vmem:[%s681 + $0x10] sm:$0xff]
    %v685 = vld [vmem:[%s681 + $0x18] sm:$0xff]
    %v686 = vld [vmem:[%s681 + $0x20] sm:$0xff]
    %v687 = vld [vmem:[%s681 + $0x28] sm:$0xff]
    %v688 = vld [vmem:[%s681 + $0x30] sm:$0xff]
    %v689 = vld [vmem:[%s681 + $0x38] sm:$0xff]
    %v690 = vld [vmem:[%s681 + $0x40] sm:$0xff]
    %v691 = vld [vmem:[%s681 + $0x48] sm:$0xff]
    %v692 = vld [vmem:[%s681 + $0x50] sm:$0xff]
    %v693 = vld [vmem:[%s681 + $0x58] sm:$0xff]
    %v694 = vld [vmem:[%s681 + $0x60] sm:$0xff]
    %v695 = vld [vmem:[%s681 + $0x68] sm:$0xff]
    %v696 = vld [vmem:[%s681 + $0x70] sm:$0xff]
    %v697 = vld [vmem:[%s681 + $0x78] sm:$0xff]
    %v714 = vunpack.c.l.b16 %v682
    %v715 = vunpack.c.h.b16 %v682
    %v716 = vunpack.c.l.b16 %v683
    %v717 = vunpack.c.h.b16 %v683
    %v718 = vunpack.c.l.b16 %v684
    %v719 = vunpack.c.h.b16 %v684
    %v720 = vunpack.c.l.b16 %v685
    %v721 = vunpack.c.h.b16 %v685
    %v722 = vunpack.c.l.b16 %v686
    %v723 = vunpack.c.h.b16 %v686
    %v724 = vunpack.c.l.b16 %v687
    %v725 = vunpack.c.h.b16 %v687
    %v726 = vunpack.c.l.b16 %v688
    %v727 = vunpack.c.h.b16 %v688
    %v728 = vunpack.c.l.b16 %v689
    %v729 = vunpack.c.h.b16 %v689
    %v730 = vunpack.c.l.b16 %v690
    %v731 = vunpack.c.h.b16 %v690
    %v732 = vunpack.c.l.b16 %v691
    %v733 = vunpack.c.h.b16 %v691
    %v734 = vunpack.c.l.b16 %v692
    %v735 = vunpack.c.h.b16 %v692
    %v736 = vunpack.c.l.b16 %v693
    %v737 = vunpack.c.h.b16 %v693
    %v738 = vunpack.c.l.b16 %v694
    %v739 = vunpack.c.h.b16 %v694
    %v740 = vunpack.c.l.b16 %v695
    %v741 = vunpack.c.h.b16 %v695
    %v742 = vunpack.c.l.b16 %v696
    %v743 = vunpack.c.h.b16 %v696
    %v744 = vunpack.c.l.b16 %v697
    %v745 = vunpack.c.h.b16 %v697
    %v746 = vpack.c.b16 %v716, %v714
    %v747 = vpack.c.b16 %v717, %v715
    %v748 = vpack.c.b16 %v720, %v718
    %v749 = vpack.c.b16 %v721, %v719
    %v750 = vpack.c.b16 %v724, %v722
    %v751 = vpack.c.b16 %v725, %v723
    %v752 = vpack.c.b16 %v728, %v726
    %v753 = vpack.c.b16 %v729, %v727
    %v754 = vpack.c.b16 %v732, %v730
    %v755 = vpack.c.b16 %v733, %v731
    %v756 = vpack.c.b16 %v736, %v734
    %v757 = vpack.c.b16 %v737, %v735
    %v758 = vpack.c.b16 %v740, %v738
    %v759 = vpack.c.b16 %v741, %v739
    %v760 = vpack.c.b16 %v744, %v742
    %v761 = vpack.c.b16 %v745, %v743
    %778 = vmatpush.bf16.msra.mxu0 %v760
    %779 = vmatpush.bf16.msra.mxu0 %v758
    %780 = vmatpush.bf16.msra.mxu0 %v756
    %781 = vmatpush.bf16.msra.mxu0 %v754
    %782 = vmatpush.bf16.msra.mxu0 %v752
    %783 = vmatpush.bf16.msra.mxu0 %v750
    %784 = vmatpush.bf16.msra.mxu0 %v748
    %785 = vmatpush.bf16.msra.mxu0 %v746
    %786 = vmatmul.bf16.gmra.mxu0 %v53
    %v787 = vpop.f32.mrf.mxu0
    %v788 = vadd.f32 0.0, %v787
    %v789 = vpop.f32.mrf.mxu0
    %v790 = vadd.f32 0.0, %v789
    %791 = vdwg.mxu0
    %792 = vmatpush.bf16.msra.mxu0 %v761
    %793 = vmatpush.bf16.msra.mxu0 %v759
    %794 = vmatpush.bf16.msra.mxu0 %v757
    %795 = vmatpush.bf16.msra.mxu0 %v755
    %796 = vmatpush.bf16.msra.mxu0 %v753
    %797 = vmatpush.bf16.msra.mxu0 %v751
    %798 = vmatpush.bf16.msra.mxu0 %v749
    %799 = vmatpush.bf16.msra.mxu0 %v747
    %800 = vmatmul.bf16.gmra.mxu0 %v53
    %v801 = vpop.f32.mrf.mxu0
    %v802 = vadd.f32 0.0, %v801
    %v803 = vpop.f32.mrf.mxu0
    %v804 = vadd.f32 0.0, %v803
    %805 = vdwg.mxu0
    %v806 = vmax.f32 %v788, %v802
    %v807 = vmax.f32 %v790, %v804
    %v808 = vmax.f32 %v679, %v806
    %v809 = vmax.f32 %v680, %v807
    %v810 = vld [vmem:[%s3] sm:$0x1]
    %v812 = vperm.slane %v810, 0
    %v814 = vadd.f32 %v808, %v812
    %v815 = vadd.f32 %v809, %v812
    %v816 = vmax.f32 %v814, 0.0
    %v817 = vmax.f32 %v815, 0.0
    %v818 = vld [vmem:[%s0] sm:$0xf]
    %v819 = vld [vmem:[%s0 + $0x4] sm:$0xf]
    %v820 = vld [vmem:[%s4] sm:$0xf]
    %v821 = vld [vmem:[%s4 + $0x4] sm:$0xf]
    %v822 = vpack.c.bf16 %v817, %v816
    %v823 = vld [vmem:[%s5] sm:$0xf]
    %v824 = vld [vmem:[%s5 + $0x4] sm:$0xf]
    %v825 = vld [vmem:[%s5 + $0x8] sm:$0xf]
    %v826 = vld [vmem:[%s5 + $0xc] sm:$0xf]
    %v827 = vld [vmem:[%s5 + $0x10] sm:$0xf]
    %v828 = vld [vmem:[%s5 + $0x14] sm:$0xf]
    %v829 = vld [vmem:[%s5 + $0x18] sm:$0xf]
    %v830 = vld [vmem:[%s5 + $0x1c] sm:$0xf]
    %v831 = vld [vmem:[%s5 + $0x20] sm:$0xf]
    %v832 = vld [vmem:[%s5 + $0x24] sm:$0xf]
    %v833 = vld [vmem:[%s5 + $0x28] sm:$0xf]
    %v834 = vld [vmem:[%s5 + $0x2c] sm:$0xf]
    %v835 = vld [vmem:[%s5 + $0x30] sm:$0xf]
    %v836 = vld [vmem:[%s5 + $0x34] sm:$0xf]
    %v837 = vld [vmem:[%s5 + $0x38] sm:$0xf]
    %v838 = vld [vmem:[%s5 + $0x3c] sm:$0xf]
    %v855 = vunpack.c.l.b16 %v823
    %v856 = vunpack.c.l.b16 %v824
    %v857 = vunpack.c.l.b16 %v825
    %v858 = vunpack.c.l.b16 %v826
    %v859 = vunpack.c.l.b16 %v827
    %v860 = vunpack.c.l.b16 %v828
    %v861 = vunpack.c.l.b16 %v829
    %v862 = vunpack.c.l.b16 %v830
    %v863 = vunpack.c.l.b16 %v831
    %v864 = vunpack.c.l.b16 %v832
    %v865 = vunpack.c.l.b16 %v833
    %v866 = vunpack.c.l.b16 %v834
    %v867 = vunpack.c.l.b16 %v835
    %v868 = vunpack.c.l.b16 %v836
    %v869 = vunpack.c.l.b16 %v837
    %v870 = vunpack.c.l.b16 %v838
    %v871 = vpack.c.b16 %v856, %v855
    %v872 = vpack.c.b16 %v858, %v857
    %v873 = vpack.c.b16 %v860, %v859
    %v874 = vpack.c.b16 %v862, %v861
    %v875 = vpack.c.b16 %v864, %v863
    %v876 = vpack.c.b16 %v866, %v865
    %v877 = vpack.c.b16 %v868, %v867
    %v878 = vpack.c.b16 %v870, %v869
    %887 = vmatpush.bf16.msra.mxu0 %v878
    %888 = vmatpush.bf16.msra.mxu0 %v877
    %889 = vmatpush.bf16.msra.mxu0 %v876
    %890 = vmatpush.bf16.msra.mxu0 %v875
    %891 = vmatpush.bf16.msra.mxu0 %v874
    %892 = vmatpush.bf16.msra.mxu0 %v873
    %893 = vmatpush.bf16.msra.mxu0 %v872
    %894 = vmatpush.bf16.msra.mxu0 %v871
    %895 = vmatmul.bf16.gmra.mxu0 %v822
    %v896 = vpop.f32.mrf.mxu0
    %v897 = vadd.f32 0.0, %v896
    %v898 = vpop.f32.mrf.mxu0
    %v899 = vadd.f32 0.0, %v898
    %900 = vdwg.mxu0
    %v903 = vunpack.c.l.b16 %v818
    %v904 = vunpack.c.l.b16 %v819
    %v905 = vpack.c.b16 %v904, %v903
    %v908 = vunpack.c.l.b16 %v820
    %v909 = vunpack.c.l.b16 %v821
    %v910 = vpack.c.b16 %v909, %v908
    %vm912 = vcmask 130048
    %v914 = vsel %vm912, %v905, 0
    %916 = vmatpush.bf16.msra.mxu0 0
    %917 = vmatpush.bf16.msra.mxu0 0
    %918 = vmatpush.bf16.msra.mxu0 0
    %919 = vmatpush.bf16.msra.mxu0 0
    %920 = vmatpush.bf16.msra.mxu0 0
    %921 = vmatpush.bf16.msra.mxu0 0
    %922 = vmatpush.bf16.msra.mxu0 0
    %923 = vmatpush.bf16.msra.mxu0 %v910
    %924 = vmatmul.bf16.gmra.mxu0 %v914
    %v925 = vpop.f32.mrf.mxu0
    %v926 = vadd.f32 %v897, %v925
    %v927 = vpop.f32.mrf.mxu0
    %v928 = vadd.f32 %v899, %v927
    %929 = vdwg.mxu0
    %v930 = vpack.c.bf16 %v928, %v926
    %v931 = vld [vmem:[%s6] sm:$0xff]
    %v932 = vld [vmem:[%s6 + $0x8] sm:$0xff]
    %v933 = vld [vmem:[%s6 + $0x10] sm:$0xff]
    %v934 = vld [vmem:[%s6 + $0x18] sm:$0xff]
    %v935 = vld [vmem:[%s6 + $0x20] sm:$0xff]
    %v936 = vld [vmem:[%s6 + $0x28] sm:$0xff]
    %v937 = vld [vmem:[%s6 + $0x30] sm:$0xff]
    %v938 = vld [vmem:[%s6 + $0x38] sm:$0xff]
    %v939 = vld [vmem:[%s6 + $0x40] sm:$0xff]
    %v940 = vld [vmem:[%s6 + $0x48] sm:$0xff]
    %v941 = vld [vmem:[%s6 + $0x50] sm:$0xff]
    %v942 = vld [vmem:[%s6 + $0x58] sm:$0xff]
    %v943 = vld [vmem:[%s6 + $0x60] sm:$0xff]
    %v944 = vld [vmem:[%s6 + $0x68] sm:$0xff]
    %v945 = vld [vmem:[%s6 + $0x70] sm:$0xff]
    %v946 = vld [vmem:[%s6 + $0x78] sm:$0xff]
    %v947 = vld [vmem:[%s7] sm:$0x3]
    %v949 = vperm.slane %v947, 0
    %v950 = vperm.slane %v947, 1
    %v969 = vunpack.c.l.b16 %v931
    %v970 = vunpack.c.h.b16 %v931
    %v971 = vunpack.c.l.b16 %v932
    %v972 = vunpack.c.h.b16 %v932
    %v973 = vunpack.c.l.b16 %v933
    %v974 = vunpack.c.h.b16 %v933
    %v975 = vunpack.c.l.b16 %v934
    %v976 = vunpack.c.h.b16 %v934
    %v977 = vunpack.c.l.b16 %v935
    %v978 = vunpack.c.h.b16 %v935
    %v979 = vunpack.c.l.b16 %v936
    %v980 = vunpack.c.h.b16 %v936
    %v981 = vunpack.c.l.b16 %v937
    %v982 = vunpack.c.h.b16 %v937
    %v983 = vunpack.c.l.b16 %v938
    %v984 = vunpack.c.h.b16 %v938
    %v985 = vunpack.c.l.b16 %v939
    %v986 = vunpack.c.h.b16 %v939
    %v987 = vunpack.c.l.b16 %v940
    %v988 = vunpack.c.h.b16 %v940
    %v989 = vunpack.c.l.b16 %v941
    %v990 = vunpack.c.h.b16 %v941
    %v991 = vunpack.c.l.b16 %v942
    %v992 = vunpack.c.h.b16 %v942
    %v993 = vunpack.c.l.b16 %v943
    %v994 = vunpack.c.h.b16 %v943
    %v995 = vunpack.c.l.b16 %v944
    %v996 = vunpack.c.h.b16 %v944
    %v997 = vunpack.c.l.b16 %v945
    %v998 = vunpack.c.h.b16 %v945
    %v999 = vunpack.c.l.b16 %v946
    %v1000 = vunpack.c.h.b16 %v946
    %v1001 = vpack.c.b16 %v971, %v969
    %v1002 = vpack.c.b16 %v972, %v970
    %v1003 = vpack.c.b16 %v975, %v973
    %v1004 = vpack.c.b16 %v976, %v974
    %v1005 = vpack.c.b16 %v979, %v977
    %v1006 = vpack.c.b16 %v980, %v978
    %v1007 = vpack.c.b16 %v983, %v981
    %v1008 = vpack.c.b16 %v984, %v982
    %v1009 = vpack.c.b16 %v987, %v985
    %v1010 = vpack.c.b16 %v988, %v986
    %v1011 = vpack.c.b16 %v991, %v989
    %v1012 = vpack.c.b16 %v992, %v990
    %v1013 = vpack.c.b16 %v995, %v993
    %v1014 = vpack.c.b16 %v996, %v994
    %v1015 = vpack.c.b16 %v999, %v997
    %v1016 = vpack.c.b16 %v1000, %v998
    %1033 = vmatpush.bf16.msra.mxu0 %v1015
    %1034 = vmatpush.bf16.msra.mxu0 %v1013
    %1035 = vmatpush.bf16.msra.mxu0 %v1011
    %1036 = vmatpush.bf16.msra.mxu0 %v1009
    %1037 = vmatpush.bf16.msra.mxu0 %v1007
    %1038 = vmatpush.bf16.msra.mxu0 %v1005
    %1039 = vmatpush.bf16.msra.mxu0 %v1003
    %1040 = vmatpush.bf16.msra.mxu0 %v1001
    %1041 = vmatmul.bf16.gmra.mxu0 %v930
    %v1042 = vpop.f32.mrf.mxu0
    %v1043 = vadd.f32 %v949, %v1042
    %v1044 = vpop.f32.mrf.mxu0
    %v1045 = vadd.f32 %v949, %v1044
    %1046 = vdwg.mxu0
    %1047 = vmatpush.bf16.msra.mxu0 %v1016
    %1048 = vmatpush.bf16.msra.mxu0 %v1014
    %1049 = vmatpush.bf16.msra.mxu0 %v1012
    %1050 = vmatpush.bf16.msra.mxu0 %v1010
    %1051 = vmatpush.bf16.msra.mxu0 %v1008
    %1052 = vmatpush.bf16.msra.mxu0 %v1006
    %1053 = vmatpush.bf16.msra.mxu0 %v1004
    %1054 = vmatpush.bf16.msra.mxu0 %v1002
    %1055 = vmatmul.bf16.gmra.mxu0 %v930
    %v1056 = vpop.f32.mrf.mxu0
    %v1057 = vadd.f32 %v950, %v1056
    %v1058 = vpop.f32.mrf.mxu0
    %v1059 = vadd.f32 %v950, %v1058
    %1060 = vdwg.mxu0
    %v1061 = vxor.u32 %v1043, 2147483648
    %v1062 = vxor.u32 %v1045, 2147483648
    %v1063 = vmul.f32 %v1061, 1.442695
    %v1064 = vpow.pop %v1063
    %v1065 = vmul.f32 %v1062, 1.442695
    %v1066 = vpow.pop %v1065
    %v1067 = vadd.f32 %v1064, 1.0
    %v1068 = vadd.f32 %v1066, 1.0
    %v1069 = vrcp.pop %v1067
    %v1070 = vmul.f32 %v1067, %v1069
    %v1071 = vsub.f32 1.0, %v1070
    %v1072 = vmul.f32 %v1069, %v1071
    %v1073 = vadd.f32 %v1069, %v1072
    %vm1074 = vweird.f32 %v1067
    %vm1075 = vweird.f32 %v1069
    %vm1076 = vmor %vm1074, %vm1075
    %v1077 = vsel %vm1076, %v1069, %v1073
    %v1078 = vand.u32 2147483647, %v1067
    %vm1079 = vcmp.eq.f32.partialorder %v1078, 8.507059e+37
    %v1080 = vand.u32 %v1067, 2147483648
    %v1081 = vor.u32 1.1754944e-38, %v1080
    %v1082 = vsel %vm1079, %v1081, %v1077
    %v1083 = vmul.f32 1.0, %v1082
    %v1084 = vrcp.pop %v1068
    %v1085 = vmul.f32 %v1068, %v1084
    %v1086 = vsub.f32 1.0, %v1085
    %v1087 = vmul.f32 %v1084, %v1086
    %v1088 = vadd.f32 %v1084, %v1087
    %vm1089 = vweird.f32 %v1068
    %vm1090 = vweird.f32 %v1084
    %vm1091 = vmor %vm1089, %vm1090
    %v1092 = vsel %vm1091, %v1084, %v1088
    %v1093 = vand.u32 2147483647, %v1068
    %vm1094 = vcmp.eq.f32.partialorder %v1093, 8.507059e+37
    %v1095 = vand.u32 %v1068, 2147483648
    %v1096 = vor.u32 1.1754944e-38, %v1095
    %v1097 = vsel %vm1094, %v1096, %v1092
    %v1098 = vmul.f32 1.0, %v1097
    %v1099 = vmax.f32 %v1057, 0.0
    %v1100 = vmax.f32 %v1059, 0.0
    %v1101 = vmul.f32 %v1083, %v1099
    %v1102 = vmul.f32 %v1098, %v1100
    %v1103 = vsub.f32 1.0, %v1083
    %v1104 = vsub.f32 1.0, %v1098
    %v1105 = vmul.f32 %v1103, %v926
    %v1106 = vmul.f32 %v1104, %v928
    %v1107 = vadd.f32 %v1101, %v1105
    %v1108 = vadd.f32 %v1102, %v1106
    %v1109 = vpack.c.bf16 %v1108, %v1107
    %s1110 = scalar_lea.vmem %s6, 128
    %v1111 = vld [vmem:[%s1110] sm:$0xff]
    %v1112 = vld [vmem:[%s1110 + $0x8] sm:$0xff]
    %v1113 = vld [vmem:[%s1110 + $0x10] sm:$0xff]
    %v1114 = vld [vmem:[%s1110 + $0x18] sm:$0xff]
    %v1115 = vld [vmem:[%s1110 + $0x20] sm:$0xff]
    %v1116 = vld [vmem:[%s1110 + $0x28] sm:$0xff]
    %v1117 = vld [vmem:[%s1110 + $0x30] sm:$0xff]
    %v1118 = vld [vmem:[%s1110 + $0x38] sm:$0xff]
    %v1119 = vld [vmem:[%s1110 + $0x40] sm:$0xff]
    %v1120 = vld [vmem:[%s1110 + $0x48] sm:$0xff]
    %v1121 = vld [vmem:[%s1110 + $0x50] sm:$0xff]
    %v1122 = vld [vmem:[%s1110 + $0x58] sm:$0xff]
    %v1123 = vld [vmem:[%s1110 + $0x60] sm:$0xff]
    %v1124 = vld [vmem:[%s1110 + $0x68] sm:$0xff]
    %v1125 = vld [vmem:[%s1110 + $0x70] sm:$0xff]
    %v1126 = vld [vmem:[%s1110 + $0x78] sm:$0xff]
    %s1127 = scalar_lea.vmem %s7, 2
    %v1128 = vld [vmem:[%s1127] sm:$0x3]
    %v1130 = vperm.slane %v1128, 0
    %v1131 = vperm.slane %v1128, 1
    %v1150 = vunpack.c.l.b16 %v1111
    %v1151 = vunpack.c.h.b16 %v1111
    %v1152 = vunpack.c.l.b16 %v1112
    %v1153 = vunpack.c.h.b16 %v1112
    %v1154 = vunpack.c.l.b16 %v1113
    %v1155 = vunpack.c.h.b16 %v1113
    %v1156 = vunpack.c.l.b16 %v1114
    %v1157 = vunpack.c.h.b16 %v1114
    %v1158 = vunpack.c.l.b16 %v1115
    %v1159 = vunpack.c.h.b16 %v1115
    %v1160 = vunpack.c.l.b16 %v1116
    %v1161 = vunpack.c.h.b16 %v1116
    %v1162 = vunpack.c.l.b16 %v1117
    %v1163 = vunpack.c.h.b16 %v1117
    %v1164 = vunpack.c.l.b16 %v1118
    %v1165 = vunpack.c.h.b16 %v1118
    %v1166 = vunpack.c.l.b16 %v1119
    %v1167 = vunpack.c.h.b16 %v1119
    %v1168 = vunpack.c.l.b16 %v1120
    %v1169 = vunpack.c.h.b16 %v1120
    %v1170 = vunpack.c.l.b16 %v1121
    %v1171 = vunpack.c.h.b16 %v1121
    %v1172 = vunpack.c.l.b16 %v1122
    %v1173 = vunpack.c.h.b16 %v1122
    %v1174 = vunpack.c.l.b16 %v1123
    %v1175 = vunpack.c.h.b16 %v1123
    %v1176 = vunpack.c.l.b16 %v1124
    %v1177 = vunpack.c.h.b16 %v1124
    %v1178 = vunpack.c.l.b16 %v1125
    %v1179 = vunpack.c.h.b16 %v1125
    %v1180 = vunpack.c.l.b16 %v1126
    %v1181 = vunpack.c.h.b16 %v1126
    %v1182 = vpack.c.b16 %v1152, %v1150
    %v1183 = vpack.c.b16 %v1153, %v1151
    %v1184 = vpack.c.b16 %v1156, %v1154
    %v1185 = vpack.c.b16 %v1157, %v1155
    %v1186 = vpack.c.b16 %v1160, %v1158
    %v1187 = vpack.c.b16 %v1161, %v1159
    %v1188 = vpack.c.b16 %v1164, %v1162
    %v1189 = vpack.c.b16 %v1165, %v1163
    %v1190 = vpack.c.b16 %v1168, %v1166
    %v1191 = vpack.c.b16 %v1169, %v1167
    %v1192 = vpack.c.b16 %v1172, %v1170
    %v1193 = vpack.c.b16 %v1173, %v1171
    %v1194 = vpack.c.b16 %v1176, %v1174
    %v1195 = vpack.c.b16 %v1177, %v1175
    %v1196 = vpack.c.b16 %v1180, %v1178
    %v1197 = vpack.c.b16 %v1181, %v1179
    %1214 = vmatpush.bf16.msra.mxu0 %v1196
    %1215 = vmatpush.bf16.msra.mxu0 %v1194
    %1216 = vmatpush.bf16.msra.mxu0 %v1192
    %1217 = vmatpush.bf16.msra.mxu0 %v1190
    %1218 = vmatpush.bf16.msra.mxu0 %v1188
    %1219 = vmatpush.bf16.msra.mxu0 %v1186
    %1220 = vmatpush.bf16.msra.mxu0 %v1184
    %1221 = vmatpush.bf16.msra.mxu0 %v1182
    %1222 = vmatmul.bf16.gmra.mxu0 %v1109
    %v1223 = vpop.f32.mrf.mxu0
    %v1224 = vadd.f32 %v1130, %v1223
    %v1225 = vpop.f32.mrf.mxu0
    %v1226 = vadd.f32 %v1130, %v1225
    %1227 = vdwg.mxu0
    %1228 = vmatpush.bf16.msra.mxu0 %v1197
    %1229 = vmatpush.bf16.msra.mxu0 %v1195
    %1230 = vmatpush.bf16.msra.mxu0 %v1193
    %1231 = vmatpush.bf16.msra.mxu0 %v1191
    %1232 = vmatpush.bf16.msra.mxu0 %v1189
    %1233 = vmatpush.bf16.msra.mxu0 %v1187
    %1234 = vmatpush.bf16.msra.mxu0 %v1185
    %1235 = vmatpush.bf16.msra.mxu0 %v1183
    %1236 = vmatmul.bf16.gmra.mxu0 %v1109
    %v1237 = vpop.f32.mrf.mxu0
    %v1238 = vadd.f32 %v1131, %v1237
    %v1239 = vpop.f32.mrf.mxu0
    %v1240 = vadd.f32 %v1131, %v1239
    %1241 = vdwg.mxu0
    %v1242 = vxor.u32 %v1224, 2147483648
    %v1243 = vxor.u32 %v1226, 2147483648
    %v1244 = vmul.f32 %v1242, 1.442695
    %v1245 = vpow.pop %v1244
    %v1246 = vmul.f32 %v1243, 1.442695
    %v1247 = vpow.pop %v1246
    %v1248 = vadd.f32 %v1245, 1.0
    %v1249 = vadd.f32 %v1247, 1.0
    %v1250 = vrcp.pop %v1248
    %v1251 = vmul.f32 %v1248, %v1250
    %v1252 = vsub.f32 1.0, %v1251
    %v1253 = vmul.f32 %v1250, %v1252
    %v1254 = vadd.f32 %v1250, %v1253
    %vm1255 = vweird.f32 %v1248
    %vm1256 = vweird.f32 %v1250
    %vm1257 = vmor %vm1255, %vm1256
    %v1258 = vsel %vm1257, %v1250, %v1254
    %v1259 = vand.u32 2147483647, %v1248
    %vm1260 = vcmp.eq.f32.partialorder %v1259, 8.507059e+37
    %v1261 = vand.u32 %v1248, 2147483648
    %v1262 = vor.u32 1.1754944e-38, %v1261
    %v1263 = vsel %vm1260, %v1262, %v1258
    %v1264 = vmul.f32 1.0, %v1263
    %v1265 = vrcp.pop %v1249
    %v1266 = vmul.f32 %v1249, %v1265
    %v1267 = vsub.f32 1.0, %v1266
    %v1268 = vmul.f32 %v1265, %v1267
    %v1269 = vadd.f32 %v1265, %v1268
    %vm1270 = vweird.f32 %v1249
    %vm1271 = vweird.f32 %v1265
    %vm1272 = vmor %vm1270, %vm1271
    %v1273 = vsel %vm1272, %v1265, %v1269
    %v1274 = vand.u32 2147483647, %v1249
    %vm1275 = vcmp.eq.f32.partialorder %v1274, 8.507059e+37
    %v1276 = vand.u32 %v1249, 2147483648
    %v1277 = vor.u32 1.1754944e-38, %v1276
    %v1278 = vsel %vm1275, %v1277, %v1273
    %v1279 = vmul.f32 1.0, %v1278
    %v1280 = vmax.f32 %v1238, 0.0
    %v1281 = vmax.f32 %v1240, 0.0
    %v1282 = vmul.f32 %v1264, %v1280
    %v1283 = vmul.f32 %v1279, %v1281
    %v1284 = vsub.f32 1.0, %v1264
    %v1285 = vsub.f32 1.0, %v1279
    %v1286 = vmul.f32 %v1284, %v1107
    %v1287 = vmul.f32 %v1285, %v1108
    %v1288 = vadd.f32 %v1282, %v1286
    %v1289 = vadd.f32 %v1283, %v1287
    %1290 = vst [vmem:[#allocation2] sm:$0xff] %v1288
    %1291 = vst [vmem:[#allocation2 + $0x8] sm:$0xff] %v1289
    // Predicated region
    $region34: #{qanet_embedding.1} parent=1 // pred_check
      _
    $region35: #{qanet_embedding.1} parent=1 // pred_check_branch
      %1293 = sbr.rel (0) target = $region37
    $region36: #{qanet_embedding.1} parent=1 // pred_region
      %1295 = vsyncadd [#allocation3], 0
      %s1296 = sshll.u32 [#allocation2], 4
      %s1297 = int_to_ptr.vmem [resolvable:$true] %s1296
      %s1298 = sshll.u32 %s8, 4
      %s1299 = int_to_ptr.hbm [resolvable:$true] %s1298
      %1304 = dma.vmem_to_hbm [thread:$0]  %s1297, 256, %s1299, [#allocation3], 128, 128, 8
    $region37: #{qanet_embedding.1} parent=1 // pred_fallthru
      _
    // Predicated region
    $region38: #{qanet_embedding.1} parent=1 // pred_check
      _
    $region39: #{qanet_embedding.1} parent=1 // pred_check_branch
      %1306 = sbr.rel (0) target = $region41
    $region40: #{qanet_embedding.1} parent=1 // pred_region
      %1308 = dma.done [#allocation3], 256
    $region41: #{qanet_embedding.1} parent=1 // pred_fallthru
      _
    %1309 = vsyncpa [#allocation3], 1

</llo_original>
